<compile_context>
chip_gen: v7x
topology: tpu7x:2x2x1
jax: 0.10.0
libtpu: 0.0.40
codegen_flags: <defaults>
</compile_context>

<pallas_src>
import jax
import jax.numpy as jnp
from jax.experimental import pallas as pl
from jax.experimental.pallas import tpu as pltpu


def _round_up(n, m):
    return ((n + m - 1) // m) * m


def _cdiv(a, b):
    return (a + b - 1) // b


def _post_level_attention_kernel(x_ref, w_ref, b_ref, q_ref, o_ref):
    # x_ref: (BB, T, D) input dtype   -- batch-block of posts
    # w_ref: (D, H)  bf16             -- projection weight (pre-cast in wrapper)
    # b_ref: (1, H)  bf16             -- projection bias   (pre-cast in wrapper)
    # q_ref: (1, H)  f32              -- context vector
    # o_ref: (BB, D)                  -- pooled output slab (sublane/lane dense)
    BB, T, D = x_ref.shape

    x3 = x_ref[...]                                     # (BB, T, D)
    x3f = x3.astype(jnp.float32)

    # (BB, T, D) -> (BB*T, D): layout-free when T % 8 == 0 for f32 inputs
    # (true in the demo); otherwise it is just a VMEM copy, still correct.
    x2 = x3.reshape(BB * T, D)

    # Projection: one large MXU matmul in bf16, f32 accumulation.
    p = jnp.dot(
        x2.astype(jnp.bfloat16), w_ref[...],
        preferred_element_type=jnp.float32,
    )                                                   # (BB*T, H) f32

    # Bias add + tanh in bf16: halves EUP occupancy on v6e/v7x (the first
    # compute slot to saturate once DMA blocks are enlarged); v5e lowers via f32.
    u = jnp.tanh(p.astype(jnp.bfloat16) + b_ref[...])   # (BB*T, H) bf16

    # Context-vector scores (f32 accumulate; VPU mul + XLU lane reduce is fully
    # hidden under the x DMA for this HBM-bound kernel).
    uf = u.astype(jnp.float32)
    scores = jnp.sum(uf * q_ref[...], axis=-1, keepdims=True)   # (BB*T, 1)
    scores = scores.reshape(BB, T, 1)                            # layout-free (T%8==0)

    # Numerically-stable softmax over the post axis T, per batch element (f32).
    m = jnp.max(scores, axis=1, keepdims=True)            # (BB, 1, 1)
    e = jnp.exp(scores - m)                                # (BB, T, 1)
    denom = jnp.sum(e, axis=1, keepdims=True)              # (BB, 1, 1)
    alpha = e * pl.reciprocal(denom, approx=True)          # EUP vrcp: ~free

    # Attention-weighted pooling of the original features (f32 accumulate).
    o_ref[...] = jnp.sum(alpha * x3f, axis=1).astype(o_ref.dtype)   # (BB, D)


def post_level_attention(x, w, b, q, *, block_b=512):
    """x: (B, T, D), w: (D, H), b: (H,), q: (H,) -> (B, D)."""
    B, T, D = x.shape
    H = w.shape[1]

    block_b = max(8, _round_up(block_b, 8))
    if B < 16:
        # Single block whose leading dim equals the array dim (no 8-alignment
        # requirement on leading dims / full-extent output rows).
        BB = B
    else:
        # Guarantee >= 2 grid steps (pipelining; v7x dual-TC sharding of the
        # "parallel" batch axis), with BB a multiple of 8 so (BB, D) output
        # slabs stay sublane/lane dense even for a ragged last block.
        BB = min(block_b, _round_up(_cdiv(B, 2), 8))
    grid_b = _cdiv(B, BB)

    # Pre-cast parameters once in the wrapper (no per-step VPU casts, smaller DMA).
    w_bf = w.astype(jnp.bfloat16)                    # used only on the MXU
    b_bf = b.reshape(1, H).astype(jnp.bfloat16)      # bf16 bias for bf16 tanh
    q_f32 = q.reshape(1, H).astype(jnp.float32)      # scores accumulated in f32

    itemsize = jnp.dtype(x.dtype).itemsize
    cost = pl.CostEstimate(
        flops=2 * B * T * D * H + 2 * B * T * H + 2 * B * T * D,
        transcendentals=B * T * H + B * T,
        bytes_accessed=B * T * D * itemsize + B * D * itemsize + D * H * 2 + 2 * H * 4,
    )

    out = pl.pallas_call(
        _post_level_attention_kernel,
        out_shape=jax.ShapeDtypeStruct((B, D), x.dtype),
        grid_spec=pltpu.PrefetchScalarGridSpec(
            num_scalar_prefetch=0,
            grid=(grid_b,),
            in_specs=[
                pl.BlockSpec((BB, T, D), lambda i: (i, 0, 0)),  # batch-block of posts
                pl.BlockSpec((D, H), lambda i: (0, 0)),          # shared projection W
                pl.BlockSpec((1, H), lambda i: (0, 0)),          # bias (bf16)
                pl.BlockSpec((1, H), lambda i: (0, 0)),          # context vector q (f32)
            ],
            out_specs=pl.BlockSpec((BB, D), lambda i: (i, 0)),   # dense (BB, D) slab
        ),
        compiler_params=pltpu.CompilerParams(
            dimension_semantics=("parallel",),
            # Give v5e (16 MiB scoped default) headroom for the enlarged tiles;
            # no-op on v6e/v7x where 32 MiB is already the default.
            vmem_limit_bytes=32 * 1024 * 1024,
        ),
        cost_estimate=cost,
    )(x, w_bf, b_bf, q_f32)
    return out


def post_level_attention_ref(x, w, b, q):
    u = jnp.tanh(jnp.einsum("btd,dh->bth", x, w) + b[None, None, :])
    scores = jnp.einsum("bth,h->bt", u, q)
    alpha = jax.nn.softmax(scores, axis=1)
    return jnp.einsum("bt,btd->bd", alpha, x)


if __name__ == "__main__":
    # Small, TPU-friendly shapes: batch=2, posts(seq)=8, feature dim=128,
    # attention hidden dim=128 (lane-aligned, T multiple of 8 sublanes).
    B, T, D, H = 2, 8, 128, 128

    key = jax.random.PRNGKey(0)
    kx, kw, kb, kq = jax.random.split(key, 4)

    x = jax.random.normal(kx, (B, T, D), dtype=jnp.float32)
    # Deterministic synthetic parameters (module __init__: Linear(D,H) + context vec H)
    w = jax.random.normal(kw, (D, H), dtype=jnp.float32) * (1.0 / jnp.sqrt(D))
    b = jax.random.normal(kb, (H,), dtype=jnp.float32) * 0.02
    q = jax.random.normal(kq, (H,), dtype=jnp.float32) * (1.0 / jnp.sqrt(H))

    out = post_level_attention(x, w, b, q)
    out = jax.block_until_ready(out)
    ref = post_level_attention_ref(x, w, b, q)
    assert out.shape == (B, D)
    # bf16 projection + bf16 bias/tanh + approx reciprocal -> relaxed tolerance.
    assert jnp.allclose(out, ref, rtol=3e-2, atol=3e-2), "mismatch vs pure-JAX reference"

    # Second small run exercising the multi-step grid path (B=48 -> BB=24, 2 steps,
    # no ragged tail), still tiny.
    B2 = 48
    x2 = jax.random.normal(jax.random.PRNGKey(1), (B2, T, D), dtype=jnp.float32)
    out2 = jax.block_until_ready(post_level_attention(x2, w, b, q))
    ref2 = post_level_attention_ref(x2, w, b, q)
    assert out2.shape == (B2, D)
    assert jnp.allclose(out2, ref2, rtol=3e-2, atol=3e-2), "mismatch (multi-block) vs reference"

    print("KERNEL_OK")
</pallas_src>

<mosaic_0001>
module attributes {stable_mosaic.version = 11 : i64} {
  func.func @_post_level_attention_kernel(%arg0: i32, %arg1: memref<2x8x128xf32, #tpu.memory_space<vmem>>, %arg2: memref<128x128xbf16, #tpu.memory_space<vmem>>, %arg3: memref<1x128xbf16, #tpu.memory_space<vmem>>, %arg4: memref<1x128xf32, #tpu.memory_space<vmem>>, %arg5: memref<2x128xf32, #tpu.memory_space<vmem>>) attributes {dimension_semantics = [#tpu.dimension_semantics<parallel>], iteration_bounds = array<i64: 1>, scalar_prefetch = 0 : i64, scratch_operands = 0 : i64, tpu.core_type = #tpu.core_type<tc>, window_params = [{transform_indices = @transform_0, window_bounds = array<i64: 2, 8, 128>}, {pipeline_mode = #tpu.pipeline_mode<synchronous>, transform_indices = @transform_1, window_bounds = array<i64: 128, 128>}, {pipeline_mode = #tpu.pipeline_mode<synchronous>, transform_indices = @transform_2, window_bounds = array<i64: 1, 128>}, {pipeline_mode = #tpu.pipeline_mode<synchronous>, transform_indices = @transform_3, window_bounds = array<i64: 1, 128>}, {transform_indices = @transform_4, window_bounds = array<i64: 2, 128>}]} {
    %c0 = arith.constant 0 : index
    %c0_0 = arith.constant 0 : index
    %c0_1 = arith.constant 0 : index
    %0 = vector.load %arg1[%c0, %c0_0, %c0_1] : memref<2x8x128xf32, #tpu.memory_space<vmem>>, vector<2x8x128xf32>
    %1 = vector.shape_cast %0 : vector<2x8x128xf32> to vector<16x128xf32>
    %2 = arith.truncf %1 : vector<16x128xf32> to vector<16x128xbf16>
    %c0_2 = arith.constant 0 : index
    %c0_3 = arith.constant 0 : index
    %3 = vector.load %arg2[%c0_2, %c0_3] : memref<128x128xbf16, #tpu.memory_space<vmem>>, vector<128x128xbf16>
    %cst = arith.constant dense<0.000000e+00> : vector<16x128xf32>
    %4 = tpu.matmul %2, %3, %cst {dimension_numbers = #tpu.dot_dimension_numbers<[1], [0], [0], [1], [0, 0, 1, 1], [], []>} : vector<16x128xbf16>, vector<128x128xbf16>, vector<16x128xf32> -> vector<16x128xf32>
    %5 = arith.truncf %4 : vector<16x128xf32> to vector<16x128xbf16>
    %c0_4 = arith.constant 0 : index
    %c0_5 = arith.constant 0 : index
    %6 = vector.load %arg3[%c0_4, %c0_5] : memref<1x128xbf16, #tpu.memory_space<vmem>>, vector<1x128xbf16>
    %7 = vector.broadcast %6 : vector<1x128xbf16> to vector<16x128xbf16>
    %8 = arith.addf %5, %7 : vector<16x128xbf16>
    %9 = math.tanh %8 : vector<16x128xbf16>
    %10 = arith.extf %9 : vector<16x128xbf16> to vector<16x128xf32>
    %c0_6 = arith.constant 0 : index
    %c0_7 = arith.constant 0 : index
    %11 = vector.load %arg4[%c0_6, %c0_7] : memref<1x128xf32, #tpu.memory_space<vmem>>, vector<1x128xf32>
    %12 = vector.broadcast %11 : vector<1x128xf32> to vector<16x128xf32>
    %13 = arith.mulf %10, %12 : vector<16x128xf32>
    %cst_8 = arith.constant dense<0.000000e+00> : vector<16xf32>
    %14 = vector.multi_reduction <add>, %13, %cst_8 [1] : vector<16x128xf32> to vector<16xf32>
    %15 = vector.shape_cast %14 : vector<16xf32> to vector<16x1xf32>
    %16 = vector.shape_cast %15 : vector<16x1xf32> to vector<2x8x1xf32>
    %cst_9 = arith.constant dense<0xFF800000> : vector<2x1xf32>
    %17 = vector.multi_reduction <maximumf>, %16, %cst_9 [1] : vector<2x8x1xf32> to vector<2x1xf32>
    %18 = vector.shape_cast %17 : vector<2x1xf32> to vector<2x1x1xf32>
    %19 = vector.broadcast %18 : vector<2x1x1xf32> to vector<2x8x1xf32>
    %20 = arith.subf %16, %19 : vector<2x8x1xf32>
    %21 = math.exp %20 : vector<2x8x1xf32>
    %cst_10 = arith.constant dense<0.000000e+00> : vector<2x1xf32>
    %22 = vector.multi_reduction <add>, %21, %cst_10 [1] : vector<2x8x1xf32> to vector<2x1xf32>
    %23 = vector.shape_cast %22 : vector<2x1xf32> to vector<2x1x1xf32>
    %24 = tpu.reciprocal %23 {approx = true} : vector<2x1x1xf32> -> vector<2x1x1xf32>
    %25 = vector.broadcast %24 : vector<2x1x1xf32> to vector<2x8x1xf32>
    %26 = arith.mulf %21, %25 : vector<2x8x1xf32>
    %27 = vector.broadcast %26 : vector<2x8x1xf32> to vector<2x8x128xf32>
    %28 = arith.mulf %27, %0 : vector<2x8x128xf32>
    %cst_11 = arith.constant dense<0.000000e+00> : vector<2x128xf32>
    %29 = vector.multi_reduction <add>, %28, %cst_11 [1] : vector<2x8x128xf32> to vector<2x128xf32>
    %c0_12 = arith.constant 0 : index
    %c0_13 = arith.constant 0 : index
    %30 = vector.load %arg5[%c0_12, %c0_13] : memref<2x128xf32, #tpu.memory_space<vmem>>, vector<2x128xf32>
    tpu.vector_store %arg5[%c0_12, %c0_13], %29 {strides = array<i32>} : memref<2x128xf32, #tpu.memory_space<vmem>>, vector<2x128xf32>,
    return
  }
  func.func @transform_0(%arg0: i32) -> (i32, i32, i32) {
    %c0_i32 = arith.constant 0 : i32
    %c0_i32_0 = arith.constant 0 : i32
    %c0_i32_1 = arith.constant 0 : i32
    return %arg0, %c0_i32, %c0_i32_0 : i32, i32, i32
  }
  func.func @transform_1(%arg0: i32) -> (i32, i32) {
    %c0_i32 = arith.constant 0 : i32
    %c0_i32_0 = arith.constant 0 : i32
    %c0_i32_1 = arith.constant 0 : i32
    return %c0_i32, %c0_i32_0 : i32, i32
  }
  func.func @transform_2(%arg0: i32) -> (i32, i32) {
    %c0_i32 = arith.constant 0 : i32
    %c0_i32_0 = arith.constant 0 : i32
    %c0_i32_1 = arith.constant 0 : i32
    return %c0_i32, %c0_i32_0 : i32, i32
  }
  func.func @transform_3(%arg0: i32) -> (i32, i32) {
    %c0_i32 = arith.constant 0 : i32
    %c0_i32_0 = arith.constant 0 : i32
    %c0_i32_1 = arith.constant 0 : i32
    return %c0_i32, %c0_i32_0 : i32, i32
  }
  func.func @transform_4(%arg0: i32) -> (i32, i32) {
    %c0_i32 = arith.constant 0 : i32
    %c0_i32_0 = arith.constant 0 : i32
    return %arg0, %c0_i32 : i32, i32
  }
}

</mosaic_0001>

<llo_original>
// kernel: tpu_custom_call.1
$region0: #{tpu_custom_call.1}
  #allocation0 [shape = 'u32[]', space=smem, size = 0x4, offset = 0x4, fixed_abs, tag = 'smem constant byte address 0x4 - core index']
  #allocation1 [shape = 'u32[144,128]{1,0:T(1,128)}', space=vmem, size = 0x12000, scoped, tag = 'internal scratch']
  %s0 = inlined_call_operand.hbm [shape: f32[2,8,128], index: 0, kind: input, shape index: {}]
  %s1 = inlined_call_operand.hbm [shape: bf16[128,128], index: 1, kind: input, shape index: {}]
  %s2 = inlined_call_operand.vmem [shape: bf16[1,128], index: 2, kind: input, shape index: {}]
  %s3 = inlined_call_operand.vmem [shape: f32[1,128], index: 3, kind: input, shape index: {}]
  %s4 = inlined_call_operand.hbm [shape: f32[2,128], index: 4, kind: output, shape index: {}]
  %s5 = sld [smem:[#allocation0]]
  $region34: #{tpu_custom_call.1} parent=0
    _
  %s7 = ssub.s32 1, %s5
  %s8 = scalar_select 0, %s7, %s5
  $region1: #{tpu_custom_call.1} parent=0
    #allocation2 [shape = 'u8[8192]{0}', space=vmem, size = 0x2000, scoped, tag = 'input window, operand 0, single buffered']
    #allocation3 [shape = 's32[1]{0}', space=sflag, size = 0x4, scoped, tag = 'scoped memory for tpu_custom_call.1']
    #allocation4 [shape = 's32[1]{0}', space=sflag, size = 0x4, scoped, tag = 'scoped memory for tpu_custom_call.1']
    #allocation5 [shape = 'u8[32768]{0}', space=vmem, size = 0x8000, scoped, tag = 'input window, operand 1, single buffered']
    #allocation6 [shape = 's32[1]{0}', space=sflag, size = 0x4, scoped, tag = 'scoped memory for tpu_custom_call.1']
    #allocation7 [shape = 'u8[1024]{0}', space=vmem, size = 0x400, scoped, tag = 'output window, operand 0, single buffered']
    %9 = vsyncpa [#allocation3], 0
    %10 = vsyncpa [#allocation6], 0
    %11 = vsyncpa [#allocation4], 0
    // Predicated region
    $region2: #{tpu_custom_call.1} parent=1 // pred_check
      _
    $region3: #{tpu_custom_call.1} parent=1 // pred_check_branch
      %13 = sbr.rel (0) target = $region5
    $region4: #{tpu_custom_call.1} parent=1 // pred_region
      %s15 = ssub.s32 256, 256
      %16 = vsyncadd [#allocation3], %s15
      %s17 = sshll.u32 [#allocation2], 4
      %s18 = int_to_ptr.vmem [resolvable:$true] %s17
      %23 = dma.hbm_to_vmem [thread:$0]  %s0, 256, %s18, [#allocation3], 128, 128, 8
    $region5: #{tpu_custom_call.1} parent=1 // pred_fallthru
      _
    // Predicated region
    $region6: #{tpu_custom_call.1} parent=1 // pred_check
      _
    $region7: #{tpu_custom_call.1} parent=1 // pred_check_branch
      %25 = sbr.rel (0) target = $region9
    $region8: #{tpu_custom_call.1} parent=1 // pred_region
      %s27 = ssub.s32 1024, 1024
      %28 = vsyncadd [#allocation6], %s27
      %s29 = sshll.u32 [#allocation5], 4
      %s30 = int_to_ptr.vmem [resolvable:$true] %s29
      %35 = dma.hbm_to_vmem [thread:$0]  %s1, 1024, %s30, [#allocation6], 64, 64, 4
    $region9: #{tpu_custom_call.1} parent=1 // pred_fallthru
      _
    // Predicated region
    $region10: #{tpu_custom_call.1} parent=1 // pred_check
      _
    $region11: #{tpu_custom_call.1} parent=1 // pred_check_branch
      %37 = sbr.rel (0) target = $region13
    $region12: #{tpu_custom_call.1} parent=1 // pred_region
      _
    $region13: #{tpu_custom_call.1} parent=1 // pred_fallthru
      _
    // Predicated region
    $region14: #{tpu_custom_call.1} parent=1 // pred_check
      _
    $region15: #{tpu_custom_call.1} parent=1 // pred_check_branch
      %39 = sbr.rel (0) target = $region17
    $region16: #{tpu_custom_call.1} parent=1 // pred_region
      _
    $region17: #{tpu_custom_call.1} parent=1 // pred_fallthru
      _
    // Predicated region
    $region18: #{tpu_custom_call.1} parent=1 // pred_check
      _
    $region19: #{tpu_custom_call.1} parent=1 // pred_check_branch
      %41 = sbr.rel (0) target = $region21
    $region20: #{tpu_custom_call.1} parent=1 // pred_region
      %42 = dma.done [#allocation3], 256
    $region21: #{tpu_custom_call.1} parent=1 // pred_fallthru
      _
    // Predicated region
    $region22: #{tpu_custom_call.1} parent=1 // pred_check
      _
    $region23: #{tpu_custom_call.1} parent=1 // pred_check_branch
      %44 = sbr.rel (0) target = $region25
    $region24: #{tpu_custom_call.1} parent=1 // pred_region
      %45 = dma.done [#allocation6], 1024
    $region25: #{tpu_custom_call.1} parent=1 // pred_fallthru
      _
    %v47 = vld [vmem:[#allocation2] sm:$0xff]
    %v48 = vld [vmem:[#allocation2 + $0x8] sm:$0xff]
    %v49 = vpack.c.bf16 %v48, %v47
    %v50 = vld [vmem:[#allocation5] sm:$0xf]
    %v51 = vld [vmem:[#allocation5 + $0x4] sm:$0xf]
    %v52 = vld [vmem:[#allocation5 + $0x8] sm:$0xf]
    %v53 = vld [vmem:[#allocation5 + $0xc] sm:$0xf]
    %v54 = vld [vmem:[#allocation5 + $0x10] sm:$0xf]
    %v55 = vld [vmem:[#allocation5 + $0x14] sm:$0xf]
    %v56 = vld [vmem:[#allocation5 + $0x18] sm:$0xf]
    %v57 = vld [vmem:[#allocation5 + $0x1c] sm:$0xf]
    %v58 = vld [vmem:[#allocation5 + $0x20] sm:$0xf]
    %v59 = vld [vmem:[#allocation5 + $0x24] sm:$0xf]
    %v60 = vld [vmem:[#allocation5 + $0x28] sm:$0xf]
    %v61 = vld [vmem:[#allocation5 + $0x2c] sm:$0xf]
    %v62 = vld [vmem:[#allocation5 + $0x30] sm:$0xf]
    %v63 = vld [vmem:[#allocation5 + $0x34] sm:$0xf]
    %v64 = vld [vmem:[#allocation5 + $0x38] sm:$0xf]
    %v65 = vld [vmem:[#allocation5 + $0x3c] sm:$0xf]
    %v82 = vunpack.c.l.b16 %v50
    %v83 = vunpack.c.l.b16 %v51
    %v84 = vunpack.c.l.b16 %v52
    %v85 = vunpack.c.l.b16 %v53
    %v86 = vunpack.c.l.b16 %v54
    %v87 = vunpack.c.l.b16 %v55
    %v88 = vunpack.c.l.b16 %v56
    %v89 = vunpack.c.l.b16 %v57
    %v90 = vunpack.c.l.b16 %v58
    %v91 = vunpack.c.l.b16 %v59
    %v92 = vunpack.c.l.b16 %v60
    %v93 = vunpack.c.l.b16 %v61
    %v94 = vunpack.c.l.b16 %v62
    %v95 = vunpack.c.l.b16 %v63
    %v96 = vunpack.c.l.b16 %v64
    %v97 = vunpack.c.l.b16 %v65
    %v98 = vpack.c.b16 %v83, %v82
    %v99 = vpack.c.b16 %v85, %v84
    %v100 = vpack.c.b16 %v87, %v86
    %v101 = vpack.c.b16 %v89, %v88
    %v102 = vpack.c.b16 %v91, %v90
    %v103 = vpack.c.b16 %v93, %v92
    %v104 = vpack.c.b16 %v95, %v94
    %v105 = vpack.c.b16 %v97, %v96
    %114 = vmatprep.subr.bf16.mxu0 0
    %115 = vmatpush1.bf16.msra.mxu0 %v98
    %116 = vmatprep.subr.bf16.mxu0 0
    %117 = vmatpush1.bf16.msra.mxu0 %v99
    %118 = vmatprep.subr.bf16.mxu0 0
    %119 = vmatpush1.bf16.msra.mxu0 %v100
    %120 = vmatprep.subr.bf16.mxu0 0
    %121 = vmatpush1.bf16.msra.mxu0 %v101
    %122 = vmatprep.subr.bf16.mxu0 0
    %123 = vmatpush1.bf16.msra.mxu0 %v102
    %124 = vmatprep.subr.bf16.mxu0 0
    %125 = vmatpush1.bf16.msra.mxu0 %v103
    %126 = vmatprep.subr.bf16.mxu0 0
    %127 = vmatpush1.bf16.msra.mxu0 %v104
    %128 = vmatprep.subr.bf16.mxu0 0
    %129 = vmatpush1.bf16.msra.mxu0 %v105
    %130 = vmatprep.subr.bf16.mxu0 0
    %131 = vmatpush1.bf16.msra.mxu0 0
    %132 = vmatprep.subr.bf16.mxu0 0
    %133 = vmatpush1.bf16.msra.mxu0 0
    %134 = vmatprep.subr.bf16.mxu0 0
    %135 = vmatpush1.bf16.msra.mxu0 0
    %136 = vmatprep.subr.bf16.mxu0 0
    %137 = vmatpush1.bf16.msra.mxu0 0
    %138 = vmatprep.subr.bf16.mxu0 0
    %139 = vmatpush1.bf16.msra.mxu0 0
    %140 = vmatprep.subr.bf16.mxu0 0
    %141 = vmatpush1.bf16.msra.mxu0 0
    %142 = vmatprep.subr.bf16.mxu0 0
    %143 = vmatpush1.bf16.msra.mxu0 0
    %144 = vmatprep.subr.bf16.mxu0 0
    %145 = vmatpush1.bf16.msra.mxu0 0
    %146 = vmatprep.mubr.bf16.mxu0 0
    %147 = vmatmul.mubr.bf16.gmra.mrb[0].mxu0 %v49
    %v148 = vpop.f32.mrb[0].mxu0
    %v149 = vadd.f32 0.0, %v148
    %v150 = vpop.f32.mrb[0].mxu0
    %v151 = vpop.f32.mrb[0].mxu0
    %v152 = vadd.f32 0.0, %v151
    %v153 = vpop.f32.mrb[0].mxu0
    %154 = vdwg.mxu0
    %v155 = vpack.c.bf16 %v152, %v149
    %v156 = vld [vmem:[%s2] sm:$0x1]
    %v158 = vpack.i.b16 %v156, %v156
    %v160 = vlaneseq
    %v161 = vshrl.u32 %v160, 7
    %v162 = vsub.s32 0, %v161
    %v163 = vrot.slane %v158, %v162
    %v164 = vadd.bf16 %v155, %v163
    %v165 = vtanh.bf16.pop %v164
    %v166 = vunpack.c.l.bf16 %v165
    %v167 = vunpack.c.h.bf16 %v165
    %v168 = vld [vmem:[%s3] sm:$0x1]
    %v170 = vlaneseq
    %v171 = vshrl.u32 %v170, 7
    %v172 = vsub.s32 0, %v171
    %v173 = vrot.slane %v168, %v172
    %v175 = vmul.f32 %v166, %v173
    %v176 = vmul.f32 %v167, %v173
    %177 = vadd.xlane.f32.xlu0 %v175
    %v178 = vpop.xlane.xlu0 %177
    %179 = vadd.xlane.f32.xlu0 %v176
    %v180 = vpop.xlane.xlu0 %179
    %v181 = vrot.slane %v178, 4
    %v182 = vmax.f32 %v178, %v181
    %v183 = vrot.slane %v182, 2
    %v184 = vmax.f32 %v182, %v183
    %v185 = vrot.slane %v184, 1
    %v186 = vmax.f32 %v184, %v185
    %v187 = vrot.slane %v180, 4
    %v188 = vmax.f32 %v180, %v187
    %v189 = vrot.slane %v188, 2
    %v190 = vmax.f32 %v188, %v189
    %v191 = vrot.slane %v190, 1
    %v192 = vmax.f32 %v190, %v191
    %v193 = vsub.f32 %v178, %v186
    %v194 = vsub.f32 %v180, %v192
    %v195 = vmul.f32 %v193, 1.442695
    %v196 = vpow.pop %v195
    %v197 = vmul.f32 %v194, 1.442695
    %v198 = vpow.pop %v197
    %v199 = vrot.slane %v196, 4
    %v200 = vadd.f32 %v196, %v199
    %v201 = vrot.slane %v200, 2
    %v202 = vadd.f32 %v200, %v201
    %v203 = vrot.slane %v202, 1
    %v204 = vadd.f32 %v202, %v203
    %v205 = vrot.slane %v198, 4
    %v206 = vadd.f32 %v198, %v205
    %v207 = vrot.slane %v206, 2
    %v208 = vadd.f32 %v206, %v207
    %v209 = vrot.slane %v208, 1
    %v210 = vadd.f32 %v208, %v209
    %v211 = vrcp.pop %v204
    %v212 = vrcp.pop %v210
    %v213 = vmul.f32 %v196, %v211
    %v214 = vmul.f32 %v198, %v212
    %v215 = vmul.f32 %v213, %v47
    %v216 = vmul.f32 %v214, %v48
    %v217 = vrot.slane %v215, 4
    %v218 = vadd.f32 %v215, %v217
    %v219 = vrot.slane %v218, 2
    %v220 = vadd.f32 %v218, %v219
    %v221 = vrot.slane %v220, 1
    %v222 = vadd.f32 %v220, %v221
    %v223 = vrot.slane %v216, 4
    %v224 = vadd.f32 %v216, %v223
    %v225 = vrot.slane %v224, 2
    %v226 = vadd.f32 %v224, %v225
    %v227 = vrot.slane %v226, 1
    %v228 = vadd.f32 %v226, %v227
    %vm231 = vcmask 1041409
    %v232 = vsel %vm231, %v228, %v222
    %234 = vst [vmem:[#allocation7] sm:$0x3] %v232
    // Predicated region
    $region26: #{tpu_custom_call.1} parent=1 // pred_check
      _
    $region27: #{tpu_custom_call.1} parent=1 // pred_check_branch
      %236 = sbr.rel (0) target = $region29
    $region28: #{tpu_custom_call.1} parent=1 // pred_region
      %s238 = ssub.s32 32, 32
      %239 = vsyncadd [#allocation4], %s238
      %s241 = sshll.u32 [#allocation7], 4
      %s242 = int_to_ptr.vmem [resolvable:$true] %s241
      %244 = dma.vmem_to_hbm [thread:$0]  %s242, 32, %s4, [#allocation4]
    $region29: #{tpu_custom_call.1} parent=1 // pred_fallthru
      _
    // Predicated region
    $region30: #{tpu_custom_call.1} parent=1 // pred_check
      _
    $region31: #{tpu_custom_call.1} parent=1 // pred_check_branch
      %246 = sbr.rel (0) target = $region33
    $region32: #{tpu_custom_call.1} parent=1 // pred_region
      %247 = dma.done [#allocation4], 32
    $region33: #{tpu_custom_call.1} parent=1 // pred_fallthru
      _
    %248 = vsyncpa [#allocation3], 1
    %249 = vsyncpa [#allocation6], 1
    %250 = vsyncpa [#allocation4], 1

</llo_original>
